<compile_context>
chip_gen: v5e
topology: v5e:2x2
jax: 0.10.0
libtpu: 0.0.40
codegen_flags: <defaults>
</compile_context>

<pallas_src>
import jax
import jax.numpy as jnp
from jax.experimental import pallas as pl
from jax.experimental.pallas import tpu as pltpu

IN_F = 2
HID_F = 8
OUT_F = 1

_LANES = 128
_BPR = _LANES // IN_F        # batch elements per interleaved row (64)


def mlp_kernel(x_ref, a0_ref, a1_ref, w1a_ref, w1b_ref, b1_ref, w2_ref, b2_ref,
               o_ref):
    # x_ref : (TR, 128) f32/bf16 -- interleaved rows [x0, x1, x0, x1, ...]
    # a0/a1 : (128, 64) f32 0/1 selection matrices (feature de-interleave)
    # w1a/w1b/b1/w2 : (HID_F, 64) f32 lane-broadcast per-hidden-unit params
    # b2    : (1, 64) f32
    # o_ref : (TR, 64)  -- y for the 64 batch elements of each row (batch-dense)
    x = x_ref[...].astype(jnp.float32)

    # De-interleave the two input features on the (otherwise idle) MXU:
    #   x0[r, k] = x[r, 2k],  x1[r, k] = x[r, 2k+1]
    x0 = jnp.dot(x, a0_ref[...], preferred_element_type=jnp.float32)  # (TR, 64)
    x1 = jnp.dot(x, a1_ref[...], preferred_element_type=jnp.float32)  # (TR, 64)

    # Layer 1 + ReLU + layer 2 as unrolled VPU FMAs (IN_F=2, HID_F=8).
    acc = jnp.zeros_like(x0)
    for j in range(HID_F):
        h = (w1a_ref[j:j + 1, :] * x0
             + w1b_ref[j:j + 1, :] * x1
             + b1_ref[j:j + 1, :])
        acc = acc + w2_ref[j:j + 1, :] * jnp.maximum(h, 0.0)

    o_ref[...] = (acc + b2_ref[...]).astype(o_ref.dtype)


def _pick_tile_rows(nb):
    # One row = 64 batch elements (512 B of f32 x).  Aim for ~8 grid steps with
    # 0.5-4 MiB of x per step so per-step DMA >> the ~0.35 us fixed step cost,
    # keep >=2 steps for big inputs (v7x megacore), never exceed the array.
    if nb <= 8:
        return nb                          # single full-array block
    tr = 8 * pl.cdiv(pl.cdiv(nb, 8), 8)    # ~8 steps, multiple of 8
    tr = max(tr, 1024)                     # floor: >= 0.5 MiB of x per step
    tr = min(tr, 8192)                     # cap:   <= 4 MiB of x per step (VMEM)
    tr = min(tr, (nb // 8) * 8)            # block must fit inside the array
    return tr


@jax.jit
def simple_nn_forward(x, w1, b1, w2, b2):
    """y = relu(x @ w1.T + b1) @ w2.T + b2   (PyTorch nn.Linear semantics).

    x: (batch, 2) f32 or bf16; w1: (8, 2); b1: (8,); w2: (1, 8); b2: (1,).
    Returns (batch, 1) float32.
    """
    batch = x.shape[0]
    pb = ((batch + _BPR - 1) // _BPR) * _BPR
    if pb != batch:                        # tiny copy, only for unaligned batch
        x = jnp.pad(x, ((0, pb - batch), (0, 0)))
    nb = pb // _BPR
    xr = x.reshape(nb, _LANES)             # free reshape: row-major contiguous

    tr = _pick_tile_rows(nb)
    grid = (pl.cdiv(nb, tr),)

    f32 = jnp.float32
    lane = jnp.arange(_LANES, dtype=jnp.int32)[:, None]
    col = jnp.arange(_BPR, dtype=jnp.int32)[None, :]
    a0 = (lane == IN_F * col).astype(f32)        # picks feature 0 (even lanes)
    a1 = (lane == IN_F * col + 1).astype(f32)    # picks feature 1 (odd lanes)

    w1a = jnp.broadcast_to(w1[:, 0:1].astype(f32), (HID_F, _BPR))
    w1b = jnp.broadcast_to(w1[:, 1:2].astype(f32), (HID_F, _BPR))
    b1l = jnp.broadcast_to(b1.reshape(HID_F, 1).astype(f32), (HID_F, _BPR))
    w2l = jnp.broadcast_to(w2.reshape(HID_F, 1).astype(f32), (HID_F, _BPR))
    b2l = jnp.broadcast_to(b2.reshape(1, 1).astype(f32), (1, _BPR))

    out = pl.pallas_call(
        mlp_kernel,
        out_shape=jax.ShapeDtypeStruct((nb, _BPR), f32),
        grid_spec=pltpu.PrefetchScalarGridSpec(
            num_scalar_prefetch=0,
            grid=grid,
            in_specs=[
                pl.BlockSpec((tr, _LANES), lambda i: (i, 0)),    # x (dense tile)
                pl.BlockSpec((_LANES, _BPR), lambda i: (0, 0)),  # a0 (resident)
                pl.BlockSpec((_LANES, _BPR), lambda i: (0, 0)),  # a1
                pl.BlockSpec((HID_F, _BPR), lambda i: (0, 0)),   # w1a
                pl.BlockSpec((HID_F, _BPR), lambda i: (0, 0)),   # w1b
                pl.BlockSpec((HID_F, _BPR), lambda i: (0, 0)),   # b1
                pl.BlockSpec((HID_F, _BPR), lambda i: (0, 0)),   # w2
                pl.BlockSpec((1, _BPR), lambda i: (0, 0)),       # b2
            ],
            out_specs=pl.BlockSpec((tr, _BPR), lambda i: (i, 0)),
        ),
        compiler_params=pltpu.CompilerParams(
            dimension_semantics=("parallel",),   # batch tiles are independent
            vmem_limit_bytes=32 * 1024 * 1024,
        ),
    )(xr, a0, a1, w1a, w1b, b1l, w2l, b2l)

    # (nb, 64) is already batch-major: free reshape; slice copies only if padded.
    return out.reshape(pb)[:batch].reshape(batch, OUT_F)


def init_params(key):
    # nn.Linear-style uniform(-1/sqrt(fan_in), 1/sqrt(fan_in)), PyTorch layout.
    k1, k2, k3, k4 = jax.random.split(key, 4)
    bound1 = 1.0 / jnp.sqrt(IN_F)
    bound2 = 1.0 / jnp.sqrt(HID_F)
    w1 = jax.random.uniform(k1, (HID_F, IN_F), jnp.float32, -bound1, bound1)
    b1 = jax.random.uniform(k2, (HID_F,), jnp.float32, -bound1, bound1)
    w2 = jax.random.uniform(k3, (OUT_F, HID_F), jnp.float32, -bound2, bound2)
    b2 = jax.random.uniform(k4, (OUT_F,), jnp.float32, -bound2, bound2)
    return w1, b1, w2, b2


def _reference(x, w1, b1, w2, b2):
    return jnp.maximum(x @ w1.T + b1, 0.0) @ w2.T + b2


if __name__ == "__main__":
    key = jax.random.PRNGKey(0)
    k_x, k_x2, k_p = jax.random.split(key, 3)
    w1, b1, w2, b2 = init_params(k_p)

    # Small batch (pads up to one 64-element interleaved row).
    batch = 8
    x = jax.random.normal(k_x, (batch, IN_F), jnp.float32)
    out = simple_nn_forward(x, w1, b1, w2, b2)
    jax.block_until_ready(out)
    ref = _reference(x, w1, b1, w2, b2)
    assert out.shape == (batch, OUT_F)
    assert jnp.allclose(out, ref, atol=1e-5, rtol=1e-5)

    # Larger, non-multiple-of-64 batch exercises padding + full-tile path.
    batch2 = 2000
    x2 = jax.random.normal(k_x2, (batch2, IN_F), jnp.float32)
    out2 = simple_nn_forward(x2, w1, b1, w2, b2)
    jax.block_until_ready(out2)
    ref2 = _reference(x2, w1, b1, w2, b2)
    assert out2.shape == (batch2, OUT_F)
    assert jnp.allclose(out2, ref2, atol=1e-5, rtol=1e-5)

    print("KERNEL_OK")
</pallas_src>

<mosaic_0001>
module attributes {stable_mosaic.version = 11 : i64} {
  func.func @mlp_kernel(%arg0: i32, %arg1: memref<1x128xf32, #tpu.memory_space<vmem>>, %arg2: memref<128x64xf32, #tpu.memory_space<vmem>>, %arg3: memref<128x64xf32, #tpu.memory_space<vmem>>, %arg4: memref<8x64xf32, #tpu.memory_space<vmem>>, %arg5: memref<8x64xf32, #tpu.memory_space<vmem>>, %arg6: memref<8x64xf32, #tpu.memory_space<vmem>>, %arg7: memref<8x64xf32, #tpu.memory_space<vmem>>, %arg8: memref<1x64xf32, #tpu.memory_space<vmem>>, %arg9: memref<1x64xf32, #tpu.memory_space<vmem>>) attributes {dimension_semantics = [#tpu.dimension_semantics<parallel>], iteration_bounds = array<i64: 1>, scalar_prefetch = 0 : i64, scratch_operands = 0 : i64, tpu.core_type = #tpu.core_type<tc>, window_params = [{transform_indices = @transform_0, window_bounds = array<i64: 1, 128>}, {pipeline_mode = #tpu.pipeline_mode<synchronous>, transform_indices = @transform_1, window_bounds = array<i64: 128, 64>}, {pipeline_mode = #tpu.pipeline_mode<synchronous>, transform_indices = @transform_2, window_bounds = array<i64: 128, 64>}, {pipeline_mode = #tpu.pipeline_mode<synchronous>, transform_indices = @transform_3, window_bounds = array<i64: 8, 64>}, {pipeline_mode = #tpu.pipeline_mode<synchronous>, transform_indices = @transform_4, window_bounds = array<i64: 8, 64>}, {pipeline_mode = #tpu.pipeline_mode<synchronous>, transform_indices = @transform_5, window_bounds = array<i64: 8, 64>}, {pipeline_mode = #tpu.pipeline_mode<synchronous>, transform_indices = @transform_6, window_bounds = array<i64: 8, 64>}, {pipeline_mode = #tpu.pipeline_mode<synchronous>, transform_indices = @transform_7, window_bounds = array<i64: 1, 64>}, {transform_indices = @transform_8, window_bounds = array<i64: 1, 64>}]} {
    %c0 = arith.constant 0 : index
    %c0_0 = arith.constant 0 : index
    %0 = vector.load %arg1[%c0, %c0_0] : memref<1x128xf32, #tpu.memory_space<vmem>>, vector<1x128xf32>
    %c0_1 = arith.constant 0 : index
    %c0_2 = arith.constant 0 : index
    %1 = vector.load %arg2[%c0_1, %c0_2] : memref<128x64xf32, #tpu.memory_space<vmem>>, vector<128x64xf32>
    %cst = arith.constant dense<0.000000e+00> : vector<1x64xf32>
    %2 = tpu.matmul %0, %1, %cst {dimension_numbers = #tpu.dot_dimension_numbers<[1], [0], [0], [1], [0, 0, 1, 1], [], []>} : vector<1x128xf32>, vector<128x64xf32>, vector<1x64xf32> -> vector<1x64xf32>
    %c0_3 = arith.constant 0 : index
    %c0_4 = arith.constant 0 : index
    %3 = vector.load %arg3[%c0_3, %c0_4] : memref<128x64xf32, #tpu.memory_space<vmem>>, vector<128x64xf32>
    %cst_5 = arith.constant dense<0.000000e+00> : vector<1x64xf32>
    %4 = tpu.matmul %0, %3, %cst_5 {dimension_numbers = #tpu.dot_dimension_numbers<[1], [0], [0], [1], [0, 0, 1, 1], [], []>} : vector<1x128xf32>, vector<128x64xf32>, vector<1x64xf32> -> vector<1x64xf32>
    %cst_6 = arith.constant 0.000000e+00 : f32
    %5 = vector.broadcast %cst_6 : f32 to vector<1x64xf32>
    %c0_7 = arith.constant 0 : index
    %c0_8 = arith.constant 0 : index
    %6 = vector.load %arg4[%c0_7, %c0_8] : memref<8x64xf32, #tpu.memory_space<vmem>>, vector<1x64xf32>
    %7 = arith.mulf %6, %2 : vector<1x64xf32>
    %c0_9 = arith.constant 0 : index
    %c0_10 = arith.constant 0 : index
    %8 = vector.load %arg5[%c0_9, %c0_10] : memref<8x64xf32, #tpu.memory_space<vmem>>, vector<1x64xf32>
    %9 = arith.mulf %8, %4 : vector<1x64xf32>
    %10 = arith.addf %7, %9 : vector<1x64xf32>
    %c0_11 = arith.constant 0 : index
    %c0_12 = arith.constant 0 : index
    %11 = vector.load %arg6[%c0_11, %c0_12] : memref<8x64xf32, #tpu.memory_space<vmem>>, vector<1x64xf32>
    %12 = arith.addf %10, %11 : vector<1x64xf32>
    %c0_13 = arith.constant 0 : index
    %c0_14 = arith.constant 0 : index
    %13 = vector.load %arg7[%c0_13, %c0_14] : memref<8x64xf32, #tpu.memory_space<vmem>>, vector<1x64xf32>
    %cst_15 = arith.constant 0.000000e+00 : f32
    %14 = vector.broadcast %cst_15 : f32 to vector<1x64xf32>
    %15 = arith.maximumf %12, %14 : vector<1x64xf32>
    %16 = arith.mulf %13, %15 : vector<1x64xf32>
    %17 = arith.addf %5, %16 : vector<1x64xf32>
    %c1 = arith.constant 1 : index
    %c0_16 = arith.constant 0 : index
    %18 = vector.load %arg4[%c1, %c0_16] : memref<8x64xf32, #tpu.memory_space<vmem>>, vector<1x64xf32>
    %19 = arith.mulf %18, %2 : vector<1x64xf32>
    %c1_17 = arith.constant 1 : index
    %c0_18 = arith.constant 0 : index
    %20 = vector.load %arg5[%c1_17, %c0_18] : memref<8x64xf32, #tpu.memory_space<vmem>>, vector<1x64xf32>
    %21 = arith.mulf %20, %4 : vector<1x64xf32>
    %22 = arith.addf %19, %21 : vector<1x64xf32>
    %c1_19 = arith.constant 1 : index
    %c0_20 = arith.constant 0 : index
    %23 = vector.load %arg6[%c1_19, %c0_20] : memref<8x64xf32, #tpu.memory_space<vmem>>, vector<1x64xf32>
    %24 = arith.addf %22, %23 : vector<1x64xf32>
    %c1_21 = arith.constant 1 : index
    %c0_22 = arith.constant 0 : index
    %25 = vector.load %arg7[%c1_21, %c0_22] : memref<8x64xf32, #tpu.memory_space<vmem>>, vector<1x64xf32>
    %cst_23 = arith.constant 0.000000e+00 : f32
    %26 = vector.broadcast %cst_23 : f32 to vector<1x64xf32>
    %27 = arith.maximumf %24, %26 : vector<1x64xf32>
    %28 = arith.mulf %25, %27 : vector<1x64xf32>
    %29 = arith.addf %17, %28 : vector<1x64xf32>
    %c2 = arith.constant 2 : index
    %c0_24 = arith.constant 0 : index
    %30 = vector.load %arg4[%c2, %c0_24] : memref<8x64xf32, #tpu.memory_space<vmem>>, vector<1x64xf32>
    %31 = arith.mulf %30, %2 : vector<1x64xf32>
    %c2_25 = arith.constant 2 : index
    %c0_26 = arith.constant 0 : index
    %32 = vector.load %arg5[%c2_25, %c0_26] : memref<8x64xf32, #tpu.memory_space<vmem>>, vector<1x64xf32>
    %33 = arith.mulf %32, %4 : vector<1x64xf32>
    %34 = arith.addf %31, %33 : vector<1x64xf32>
    %c2_27 = arith.constant 2 : index
    %c0_28 = arith.constant 0 : index
    %35 = vector.load %arg6[%c2_27, %c0_28] : memref<8x64xf32, #tpu.memory_space<vmem>>, vector<1x64xf32>
    %36 = arith.addf %34, %35 : vector<1x64xf32>
    %c2_29 = arith.constant 2 : index
    %c0_30 = arith.constant 0 : index
    %37 = vector.load %arg7[%c2_29, %c0_30] : memref<8x64xf32, #tpu.memory_space<vmem>>, vector<1x64xf32>
    %cst_31 = arith.constant 0.000000e+00 : f32
    %38 = vector.broadcast %cst_31 : f32 to vector<1x64xf32>
    %39 = arith.maximumf %36, %38 : vector<1x64xf32>
    %40 = arith.mulf %37, %39 : vector<1x64xf32>
    %41 = arith.addf %29, %40 : vector<1x64xf32>
    %c3 = arith.constant 3 : index
    %c0_32 = arith.constant 0 : index
    %42 = vector.load %arg4[%c3, %c0_32] : memref<8x64xf32, #tpu.memory_space<vmem>>, vector<1x64xf32>
    %43 = arith.mulf %42, %2 : vector<1x64xf32>
    %c3_33 = arith.constant 3 : index
    %c0_34 = arith.constant 0 : index
    %44 = vector.load %arg5[%c3_33, %c0_34] : memref<8x64xf32, #tpu.memory_space<vmem>>, vector<1x64xf32>
    %45 = arith.mulf %44, %4 : vector<1x64xf32>
    %46 = arith.addf %43, %45 : vector<1x64xf32>
    %c3_35 = arith.constant 3 : index
    %c0_36 = arith.constant 0 : index
    %47 = vector.load %arg6[%c3_35, %c0_36] : memref<8x64xf32, #tpu.memory_space<vmem>>, vector<1x64xf32>
    %48 = arith.addf %46, %47 : vector<1x64xf32>
    %c3_37 = arith.constant 3 : index
    %c0_38 = arith.constant 0 : index
    %49 = vector.load %arg7[%c3_37, %c0_38] : memref<8x64xf32, #tpu.memory_space<vmem>>, vector<1x64xf32>
    %cst_39 = arith.constant 0.000000e+00 : f32
    %50 = vector.broadcast %cst_39 : f32 to vector<1x64xf32>
    %51 = arith.maximumf %48, %50 : vector<1x64xf32>
    %52 = arith.mulf %49, %51 : vector<1x64xf32>
    %53 = arith.addf %41, %52 : vector<1x64xf32>
    %c4 = arith.constant 4 : index
    %c0_40 = arith.constant 0 : index
    %54 = vector.load %arg4[%c4, %c0_40] : memref<8x64xf32, #tpu.memory_space<vmem>>, vector<1x64xf32>
    %55 = arith.mulf %54, %2 : vector<1x64xf32>
    %c4_41 = arith.constant 4 : index
    %c0_42 = arith.constant 0 : index
    %56 = vector.load %arg5[%c4_41, %c0_42] : memref<8x64xf32, #tpu.memory_space<vmem>>, vector<1x64xf32>
    %57 = arith.mulf %56, %4 : vector<1x64xf32>
    %58 = arith.addf %55, %57 : vector<1x64xf32>
    %c4_43 = arith.constant 4 : index
    %c0_44 = arith.constant 0 : index
    %59 = vector.load %arg6[%c4_43, %c0_44] : memref<8x64xf32, #tpu.memory_space<vmem>>, vector<1x64xf32>
    %60 = arith.addf %58, %59 : vector<1x64xf32>
    %c4_45 = arith.constant 4 : index
    %c0_46 = arith.constant 0 : index
    %61 = vector.load %arg7[%c4_45, %c0_46] : memref<8x64xf32, #tpu.memory_space<vmem>>, vector<1x64xf32>
    %cst_47 = arith.constant 0.000000e+00 : f32
    %62 = vector.broadcast %cst_47 : f32 to vector<1x64xf32>
    %63 = arith.maximumf %60, %62 : vector<1x64xf32>
    %64 = arith.mulf %61, %63 : vector<1x64xf32>
    %65 = arith.addf %53, %64 : vector<1x64xf32>
    %c5 = arith.constant 5 : index
    %c0_48 = arith.constant 0 : index
    %66 = vector.load %arg4[%c5, %c0_48] : memref<8x64xf32, #tpu.memory_space<vmem>>, vector<1x64xf32>
    %67 = arith.mulf %66, %2 : vector<1x64xf32>
    %c5_49 = arith.constant 5 : index
    %c0_50 = arith.constant 0 : index
    %68 = vector.load %arg5[%c5_49, %c0_50] : memref<8x64xf32, #tpu.memory_space<vmem>>, vector<1x64xf32>
    %69 = arith.mulf %68, %4 : vector<1x64xf32>
    %70 = arith.addf %67, %69 : vector<1x64xf32>
    %c5_51 = arith.constant 5 : index
    %c0_52 = arith.constant 0 : index
    %71 = vector.load %arg6[%c5_51, %c0_52] : memref<8x64xf32, #tpu.memory_space<vmem>>, vector<1x64xf32>
    %72 = arith.addf %70, %71 : vector<1x64xf32>
    %c5_53 = arith.constant 5 : index
    %c0_54 = arith.constant 0 : index
    %73 = vector.load %arg7[%c5_53, %c0_54] : memref<8x64xf32, #tpu.memory_space<vmem>>, vector<1x64xf32>
    %cst_55 = arith.constant 0.000000e+00 : f32
    %74 = vector.broadcast %cst_55 : f32 to vector<1x64xf32>
    %75 = arith.maximumf %72, %74 : vector<1x64xf32>
    %76 = arith.mulf %73, %75 : vector<1x64xf32>
    %77 = arith.addf %65, %76 : vector<1x64xf32>
    %c6 = arith.constant 6 : index
    %c0_56 = arith.constant 0 : index
    %78 = vector.load %arg4[%c6, %c0_56] : memref<8x64xf32, #tpu.memory_space<vmem>>, vector<1x64xf32>
    %79 = arith.mulf %78, %2 : vector<1x64xf32>
    %c6_57 = arith.constant 6 : index
    %c0_58 = arith.constant 0 : index
    %80 = vector.load %arg5[%c6_57, %c0_58] : memref<8x64xf32, #tpu.memory_space<vmem>>, vector<1x64xf32>
    %81 = arith.mulf %80, %4 : vector<1x64xf32>
    %82 = arith.addf %79, %81 : vector<1x64xf32>
    %c6_59 = arith.constant 6 : index
    %c0_60 = arith.constant 0 : index
    %83 = vector.load %arg6[%c6_59, %c0_60] : memref<8x64xf32, #tpu.memory_space<vmem>>, vector<1x64xf32>
    %84 = arith.addf %82, %83 : vector<1x64xf32>
    %c6_61 = arith.constant 6 : index
    %c0_62 = arith.constant 0 : index
    %85 = vector.load %arg7[%c6_61, %c0_62] : memref<8x64xf32, #tpu.memory_space<vmem>>, vector<1x64xf32>
    %cst_63 = arith.constant 0.000000e+00 : f32
    %86 = vector.broadcast %cst_63 : f32 to vector<1x64xf32>
    %87 = arith.maximumf %84, %86 : vector<1x64xf32>
    %88 = arith.mulf %85, %87 : vector<1x64xf32>
    %89 = arith.addf %77, %88 : vector<1x64xf32>
    %c7 = arith.constant 7 : index
    %c0_64 = arith.constant 0 : index
    %90 = vector.load %arg4[%c7, %c0_64] : memref<8x64xf32, #tpu.memory_space<vmem>>, vector<1x64xf32>
    %91 = arith.mulf %90, %2 : vector<1x64xf32>
    %c7_65 = arith.constant 7 : index
    %c0_66 = arith.constant 0 : index
    %92 = vector.load %arg5[%c7_65, %c0_66] : memref<8x64xf32, #tpu.memory_space<vmem>>, vector<1x64xf32>
    %93 = arith.mulf %92, %4 : vector<1x64xf32>
    %94 = arith.addf %91, %93 : vector<1x64xf32>
    %c7_67 = arith.constant 7 : index
    %c0_68 = arith.constant 0 : index
    %95 = vector.load %arg6[%c7_67, %c0_68] : memref<8x64xf32, #tpu.memory_space<vmem>>, vector<1x64xf32>
    %96 = arith.addf %94, %95 : vector<1x64xf32>
    %c7_69 = arith.constant 7 : index
    %c0_70 = arith.constant 0 : index
    %97 = vector.load %arg7[%c7_69, %c0_70] : memref<8x64xf32, #tpu.memory_space<vmem>>, vector<1x64xf32>
    %cst_71 = arith.constant 0.000000e+00 : f32
    %98 = vector.broadcast %cst_71 : f32 to vector<1x64xf32>
    %99 = arith.maximumf %96, %98 : vector<1x64xf32>
    %100 = arith.mulf %97, %99 : vector<1x64xf32>
    %101 = arith.addf %89, %100 : vector<1x64xf32>
    %c0_72 = arith.constant 0 : index
    %c0_73 = arith.constant 0 : index
    %102 = vector.load %arg8[%c0_72, %c0_73] : memref<1x64xf32, #tpu.memory_space<vmem>>, vector<1x64xf32>
    %103 = arith.addf %101, %102 : vector<1x64xf32>
    %c0_74 = arith.constant 0 : index
    %c0_75 = arith.constant 0 : index
    %104 = vector.load %arg9[%c0_74, %c0_75] : memref<1x64xf32, #tpu.memory_space<vmem>>, vector<1x64xf32>
    tpu.vector_store %arg9[%c0_74, %c0_75], %103 {strides = array<i32>} : memref<1x64xf32, #tpu.memory_space<vmem>>, vector<1x64xf32>,
    return
  }
  func.func @transform_0(%arg0: i32) -> (i32, i32) {
    %c0_i32 = arith.constant 0 : i32
    %c0_i32_0 = arith.constant 0 : i32
    return %arg0, %c0_i32 : i32, i32
  }
  func.func @transform_1(%arg0: i32) -> (i32, i32) {
    %c0_i32 = arith.constant 0 : i32
    %c0_i32_0 = arith.constant 0 : i32
    %c0_i32_1 = arith.constant 0 : i32
    return %c0_i32, %c0_i32_0 : i32, i32
  }
  func.func @transform_2(%arg0: i32) -> (i32, i32) {
    %c0_i32 = arith.constant 0 : i32
    %c0_i32_0 = arith.constant 0 : i32
    %c0_i32_1 = arith.constant 0 : i32
    return %c0_i32, %c0_i32_0 : i32, i32
  }
  func.func @transform_3(%arg0: i32) -> (i32, i32) {
    %c0_i32 = arith.constant 0 : i32
    %c0_i32_0 = arith.constant 0 : i32
    %c0_i32_1 = arith.constant 0 : i32
    return %c0_i32, %c0_i32_0 : i32, i32
  }
  func.func @transform_4(%arg0: i32) -> (i32, i32) {
    %c0_i32 = arith.constant 0 : i32
    %c0_i32_0 = arith.constant 0 : i32
    %c0_i32_1 = arith.constant 0 : i32
    return %c0_i32, %c0_i32_0 : i32, i32
  }
  func.func @transform_5(%arg0: i32) -> (i32, i32) {
    %c0_i32 = arith.constant 0 : i32
    %c0_i32_0 = arith.constant 0 : i32
    %c0_i32_1 = arith.constant 0 : i32
    return %c0_i32, %c0_i32_0 : i32, i32
  }
  func.func @transform_6(%arg0: i32) -> (i32, i32) {
    %c0_i32 = arith.constant 0 : i32
    %c0_i32_0 = arith.constant 0 : i32
    %c0_i32_1 = arith.constant 0 : i32
    return %c0_i32, %c0_i32_0 : i32, i32
  }
  func.func @transform_7(%arg0: i32) -> (i32, i32) {
    %c0_i32 = arith.constant 0 : i32
    %c0_i32_0 = arith.constant 0 : i32
    %c0_i32_1 = arith.constant 0 : i32
    return %c0_i32, %c0_i32_0 : i32, i32
  }
  func.func @transform_8(%arg0: i32) -> (i32, i32) {
    %c0_i32 = arith.constant 0 : i32
    %c0_i32_0 = arith.constant 0 : i32
    return %arg0, %c0_i32 : i32, i32
  }
}

</mosaic_0001>

<llo_original>
// kernel: simple_nn_forward.1
$region0: #{simple_nn_forward.1}
  #allocation0 [shape = 'u32[]', space=smem, size = 0x4, offset = 0x4, fixed_abs, tag = 'smem constant byte address 0x4 - core index']
  #allocation1 [shape = 'u32[72,128]{1,0:T(1,128)}', space=vmem, size = 0x9000, scoped, tag = 'internal scratch']
  %s0 = inlined_call_operand.vmem [shape: f32[1,128], index: 0, kind: input, shape index: {}]
  %s1 = inlined_call_operand.vmem [shape: f32[128,64], index: 1, kind: input, shape index: {}]
  %s2 = inlined_call_operand.vmem [shape: f32[128,64], index: 2, kind: input, shape index: {}]
  %s3 = inlined_call_operand.vmem [shape: f32[8,64], index: 3, kind: input, shape index: {}]
  %s4 = inlined_call_operand.vmem [shape: f32[8,64], index: 4, kind: input, shape index: {}]
  %s5 = inlined_call_operand.vmem [shape: f32[8,64], index: 5, kind: input, shape index: {}]
  %s6 = inlined_call_operand.vmem [shape: f32[8,64], index: 6, kind: input, shape index: {}]
  %s7 = inlined_call_operand.vmem [shape: f32[1,64], index: 7, kind: input, shape index: {}]
  %s8 = inlined_call_operand.vmem [shape: f32[1,64], index: 8, kind: output, shape index: {}]
  %s9 = sld [smem:[#allocation0]]
  $region42: #{simple_nn_forward.1} parent=0
    _
  %s11 = ssub.s32 1, %s9
  %s12 = scalar_select 0, %s11, %s9
  // Predicated region
  $region2: #{simple_nn_forward.1} parent=0 // pred_check
    _
  $region3: #{simple_nn_forward.1} parent=0 // pred_check_branch
    %14 = sbr.rel (0) target = $region5
  $region4: #{simple_nn_forward.1} parent=0 // pred_region
    _
  $region5: #{simple_nn_forward.1} parent=0 // pred_fallthru
    _
  // Predicated region
  $region6: #{simple_nn_forward.1} parent=0 // pred_check
    _
  $region7: #{simple_nn_forward.1} parent=0 // pred_check_branch
    %16 = sbr.rel (0) target = $region9
  $region8: #{simple_nn_forward.1} parent=0 // pred_region
    _
  $region9: #{simple_nn_forward.1} parent=0 // pred_fallthru
    _
  // Predicated region
  $region10: #{simple_nn_forward.1} parent=0 // pred_check
    _
  $region11: #{simple_nn_forward.1} parent=0 // pred_check_branch
    %18 = sbr.rel (0) target = $region13
  $region12: #{simple_nn_forward.1} parent=0 // pred_region
    _
  $region13: #{simple_nn_forward.1} parent=0 // pred_fallthru
    _
  // Predicated region
  $region14: #{simple_nn_forward.1} parent=0 // pred_check
    _
  $region15: #{simple_nn_forward.1} parent=0 // pred_check_branch
    %20 = sbr.rel (0) target = $region17
  $region16: #{simple_nn_forward.1} parent=0 // pred_region
    _
  $region17: #{simple_nn_forward.1} parent=0 // pred_fallthru
    _
  // Predicated region
  $region18: #{simple_nn_forward.1} parent=0 // pred_check
    _
  $region19: #{simple_nn_forward.1} parent=0 // pred_check_branch
    %22 = sbr.rel (0) target = $region21
  $region20: #{simple_nn_forward.1} parent=0 // pred_region
    _
  $region21: #{simple_nn_forward.1} parent=0 // pred_fallthru
    _
  // Predicated region
  $region22: #{simple_nn_forward.1} parent=0 // pred_check
    _
  $region23: #{simple_nn_forward.1} parent=0 // pred_check_branch
    %24 = sbr.rel (0) target = $region25
  $region24: #{simple_nn_forward.1} parent=0 // pred_region
    _
  $region25: #{simple_nn_forward.1} parent=0 // pred_fallthru
    _
  // Predicated region
  $region26: #{simple_nn_forward.1} parent=0 // pred_check
    _
  $region27: #{simple_nn_forward.1} parent=0 // pred_check_branch
    %26 = sbr.rel (0) target = $region29
  $region28: #{simple_nn_forward.1} parent=0 // pred_region
    _
  $region29: #{simple_nn_forward.1} parent=0 // pred_fallthru
    _
  // Predicated region
  $region30: #{simple_nn_forward.1} parent=0 // pred_check
    _
  $region31: #{simple_nn_forward.1} parent=0 // pred_check_branch
    %28 = sbr.rel (0) target = $region33
  $region32: #{simple_nn_forward.1} parent=0 // pred_region
    _
  $region33: #{simple_nn_forward.1} parent=0 // pred_fallthru
    _
  %v29 = vld [vmem:[%s0] sm:$0x1]
  %v30 = vld [vmem:[%s1] sm:$0xff]
  %v31 = vld [vmem:[%s1 + $0x8] sm:$0xff]
  %v32 = vld [vmem:[%s1 + $0x10] sm:$0xff]
  %v33 = vld [vmem:[%s1 + $0x18] sm:$0xff]
  %v34 = vld [vmem:[%s1 + $0x20] sm:$0xff]
  %v35 = vld [vmem:[%s1 + $0x28] sm:$0xff]
  %v36 = vld [vmem:[%s1 + $0x30] sm:$0xff]
  %v37 = vld [vmem:[%s1 + $0x38] sm:$0xff]
  %v38 = vld [vmem:[%s1 + $0x40] sm:$0xff]
  %v39 = vld [vmem:[%s1 + $0x48] sm:$0xff]
  %v40 = vld [vmem:[%s1 + $0x50] sm:$0xff]
  %v41 = vld [vmem:[%s1 + $0x58] sm:$0xff]
  %v42 = vld [vmem:[%s1 + $0x60] sm:$0xff]
  %v43 = vld [vmem:[%s1 + $0x68] sm:$0xff]
  %v44 = vld [vmem:[%s1 + $0x70] sm:$0xff]
  %v45 = vld [vmem:[%s1 + $0x78] sm:$0xff]
  %46 = vmatpush.msra.mxu0 %v45
  %47 = vmatpush.msra.mxu0 %v44
  %48 = vmatpush.msra.mxu0 %v43
  %49 = vmatpush.msra.mxu0 %v42
  %50 = vmatpush.msra.mxu0 %v41
  %51 = vmatpush.msra.mxu0 %v40
  %52 = vmatpush.msra.mxu0 %v39
  %53 = vmatpush.msra.mxu0 %v38
  %54 = vmatpush.msra.mxu0 %v37
  %55 = vmatpush.msra.mxu0 %v36
  %56 = vmatpush.msra.mxu0 %v35
  %57 = vmatpush.msra.mxu0 %v34
  %58 = vmatpush.msra.mxu0 %v33
  %59 = vmatpush.msra.mxu0 %v32
  %60 = vmatpush.msra.mxu0 %v31
  %61 = vmatpush.msra.mxu0 %v30
  %62 = vmatmul.f32.gmra.mxu0 %v29
  %v63 = vpop.f32.mrf.mxu0
  %v64 = vadd.f32 0.0, %v63
  %65 = vdwg.mxu0
  %v66 = vld [vmem:[%s2] sm:$0xff]
  %v67 = vld [vmem:[%s2 + $0x8] sm:$0xff]
  %v68 = vld [vmem:[%s2 + $0x10] sm:$0xff]
  %v69 = vld [vmem:[%s2 + $0x18] sm:$0xff]
  %v70 = vld [vmem:[%s2 + $0x20] sm:$0xff]
  %v71 = vld [vmem:[%s2 + $0x28] sm:$0xff]
  %v72 = vld [vmem:[%s2 + $0x30] sm:$0xff]
  %v73 = vld [vmem:[%s2 + $0x38] sm:$0xff]
  %v74 = vld [vmem:[%s2 + $0x40] sm:$0xff]
  %v75 = vld [vmem:[%s2 + $0x48] sm:$0xff]
  %v76 = vld [vmem:[%s2 + $0x50] sm:$0xff]
  %v77 = vld [vmem:[%s2 + $0x58] sm:$0xff]
  %v78 = vld [vmem:[%s2 + $0x60] sm:$0xff]
  %v79 = vld [vmem:[%s2 + $0x68] sm:$0xff]
  %v80 = vld [vmem:[%s2 + $0x70] sm:$0xff]
  %v81 = vld [vmem:[%s2 + $0x78] sm:$0xff]
  %82 = vmatpush.msra.mxu0 %v81
  %83 = vmatpush.msra.mxu0 %v80
  %84 = vmatpush.msra.mxu0 %v79
  %85 = vmatpush.msra.mxu0 %v78
  %86 = vmatpush.msra.mxu0 %v77
  %87 = vmatpush.msra.mxu0 %v76
  %88 = vmatpush.msra.mxu0 %v75
  %89 = vmatpush.msra.mxu0 %v74
  %90 = vmatpush.msra.mxu0 %v73
  %91 = vmatpush.msra.mxu0 %v72
  %92 = vmatpush.msra.mxu0 %v71
  %93 = vmatpush.msra.mxu0 %v70
  %94 = vmatpush.msra.mxu0 %v69
  %95 = vmatpush.msra.mxu0 %v68
  %96 = vmatpush.msra.mxu0 %v67
  %97 = vmatpush.msra.mxu0 %v66
  %98 = vmatmul.f32.gmra.mxu0 %v29
  %v99 = vpop.f32.mrf.mxu0
  %v100 = vadd.f32 0.0, %v99
  %101 = vdwg.mxu0
  %v102 = vld [vmem:[%s3] sm:$0x1]
  %v103 = vmul.f32 %v102, %v64
  %v104 = vld [vmem:[%s4] sm:$0x1]
  %v105 = vmul.f32 %v104, %v100
  %v106 = vadd.f32 %v103, %v105
  %v107 = vld [vmem:[%s5] sm:$0x1]
  %v108 = vadd.f32 %v106, %v107
  %v109 = vld [vmem:[%s6] sm:$0x1]
  %v110 = vmax.f32 %v108, 0.0
  %v111 = vmul.f32 %v109, %v110
  %v112 = vadd.f32 %v111, 0.0
  %v113 = vld [vmem:[%s3 + $0x1] sm:$0x1]
  %v114 = vmul.f32 %v113, %v64
  %v115 = vld [vmem:[%s4 + $0x1] sm:$0x1]
  %v116 = vmul.f32 %v115, %v100
  %v117 = vadd.f32 %v114, %v116
  %v118 = vld [vmem:[%s5 + $0x1] sm:$0x1]
  %v119 = vadd.f32 %v117, %v118
  %v120 = vld [vmem:[%s6 + $0x1] sm:$0x1]
  %v121 = vmax.f32 %v119, 0.0
  %v122 = vmul.f32 %v120, %v121
  %v123 = vadd.f32 %v112, %v122
  %v124 = vld [vmem:[%s3 + $0x2] sm:$0x1]
  %v125 = vmul.f32 %v124, %v64
  %v126 = vld [vmem:[%s4 + $0x2] sm:$0x1]
  %v127 = vmul.f32 %v126, %v100
  %v128 = vadd.f32 %v125, %v127
  %v129 = vld [vmem:[%s5 + $0x2] sm:$0x1]
  %v130 = vadd.f32 %v128, %v129
  %v131 = vld [vmem:[%s6 + $0x2] sm:$0x1]
  %v132 = vmax.f32 %v130, 0.0
  %v133 = vmul.f32 %v131, %v132
  %v134 = vadd.f32 %v123, %v133
  %v135 = vld [vmem:[%s3 + $0x3] sm:$0x1]
  %v136 = vmul.f32 %v135, %v64
  %v137 = vld [vmem:[%s4 + $0x3] sm:$0x1]
  %v138 = vmul.f32 %v137, %v100
  %v139 = vadd.f32 %v136, %v138
  %v140 = vld [vmem:[%s5 + $0x3] sm:$0x1]
  %v141 = vadd.f32 %v139, %v140
  %v142 = vld [vmem:[%s6 + $0x3] sm:$0x1]
  %v143 = vmax.f32 %v141, 0.0
  %v144 = vmul.f32 %v142, %v143
  %v145 = vadd.f32 %v134, %v144
  %v146 = vld [vmem:[%s3 + $0x4] sm:$0x1]
  %v147 = vmul.f32 %v146, %v64
  %v148 = vld [vmem:[%s4 + $0x4] sm:$0x1]
  %v149 = vmul.f32 %v148, %v100
  %v150 = vadd.f32 %v147, %v149
  %v151 = vld [vmem:[%s5 + $0x4] sm:$0x1]
  %v152 = vadd.f32 %v150, %v151
  %v153 = vld [vmem:[%s6 + $0x4] sm:$0x1]
  %v154 = vmax.f32 %v152, 0.0
  %v155 = vmul.f32 %v153, %v154
  %v156 = vadd.f32 %v145, %v155
  %v157 = vld [vmem:[%s3 + $0x5] sm:$0x1]
  %v158 = vmul.f32 %v157, %v64
  %v159 = vld [vmem:[%s4 + $0x5] sm:$0x1]
  %v160 = vmul.f32 %v159, %v100
  %v161 = vadd.f32 %v158, %v160
  %v162 = vld [vmem:[%s5 + $0x5] sm:$0x1]
  %v163 = vadd.f32 %v161, %v162
  %v164 = vld [vmem:[%s6 + $0x5] sm:$0x1]
  %v165 = vmax.f32 %v163, 0.0
  %v166 = vmul.f32 %v164, %v165
  %v167 = vadd.f32 %v156, %v166
  %v168 = vld [vmem:[%s3 + $0x6] sm:$0x1]
  %v169 = vmul.f32 %v168, %v64
  %v170 = vld [vmem:[%s4 + $0x6] sm:$0x1]
  %v171 = vmul.f32 %v170, %v100
  %v172 = vadd.f32 %v169, %v171
  %v173 = vld [vmem:[%s5 + $0x6] sm:$0x1]
  %v174 = vadd.f32 %v172, %v173
  %v175 = vld [vmem:[%s6 + $0x6] sm:$0x1]
  %v176 = vmax.f32 %v174, 0.0
  %v177 = vmul.f32 %v175, %v176
  %v178 = vadd.f32 %v167, %v177
  %v179 = vld [vmem:[%s3 + $0x7] sm:$0x1]
  %v180 = vmul.f32 %v179, %v64
  %v181 = vld [vmem:[%s4 + $0x7] sm:$0x1]
  %v182 = vmul.f32 %v181, %v100
  %v183 = vadd.f32 %v180, %v182
  %v184 = vld [vmem:[%s5 + $0x7] sm:$0x1]
  %v185 = vadd.f32 %v183, %v184
  %v186 = vld [vmem:[%s6 + $0x7] sm:$0x1]
  %v187 = vmax.f32 %v185, 0.0
  %v188 = vmul.f32 %v186, %v187
  %v189 = vadd.f32 %v178, %v188
  %v190 = vld [vmem:[%s7] sm:$0x1]
  %v191 = vadd.f32 %v189, %v190
  %vm192 = vcmask 516096
  %193 = vst.msk [vmem:[%s8] sm:$0x1] %vm192, %v191
  // Predicated region
  $region34: #{simple_nn_forward.1} parent=0 // pred_check
    _
  $region35: #{simple_nn_forward.1} parent=0 // pred_check_branch
    %195 = sbr.rel (0) target = $region37
  $region36: #{simple_nn_forward.1} parent=0 // pred_region
    _
  $region37: #{simple_nn_forward.1} parent=0 // pred_fallthru
    _
  // Predicated region
  $region38: #{simple_nn_forward.1} parent=0 // pred_check
    _
  $region39: #{simple_nn_forward.1} parent=0 // pred_check_branch
    %197 = sbr.rel (0) target = $region41
  $region40: #{simple_nn_forward.1} parent=0 // pred_region
    _
  $region41: #{simple_nn_forward.1} parent=0 // pred_fallthru
    _

</llo_original>
